<compile_context>
chip_gen: v7x
topology: tpu7x:2x2x1
jax: 0.10.0
libtpu: 0.0.40
codegen_flags: <defaults>
</compile_context>

<pallas_src>
import functools
import math

import jax
import jax.numpy as jnp
from jax.experimental import pallas as pl
from jax.experimental.pallas import tpu as pltpu


def _round_up(x, m):
    return ((x + m - 1) // m) * m


def _fused_iel_kernel(x_ref, wf_ref, bf_ref, s_ref, ws_ref, bs_ref, o_ref, *, multiply):
    # fe_i = x_i @ W_i + b_i   (MXU, f32 accumulation; bias add + combine on VPU, f32)
    fe = jnp.dot(x_ref[...], wf_ref[...], preferred_element_type=jnp.float32)
    fe = fe + bf_ref[...]                       # (B, nf) + (1, nf) broadcast
    # se = semantics @ W_s + b_s.  Operands have constant block indices, so they
    # are not re-fetched across grid steps; recomputing this tiny matmul per step
    # (and per core on v7x) is negligible and avoids cross-step/cross-core state.
    se = jnp.dot(s_ref[...], ws_ref[...], preferred_element_type=jnp.float32)
    se = se + bs_ref[...]
    res = se * fe if multiply else se + fe      # static Python branch
    o_ref[...] = res.astype(o_ref.dtype)


@functools.partial(jax.jit, static_argnames=("multiply", "use_bf16"))
def semantics_enhanced_iel(input_feats, semantics, params, *, multiply=False,
                           use_bf16=False):
    """params = {'f2e': [(W_i, b_i), ...], 's2e': (W_s, b_s)} with W stored as (in, nf)."""
    M = len(input_feats)
    assert M == len(params["f2e"]) and M >= 1
    B = input_feats[0].shape[0]
    w_s, b_s = params["s2e"]
    S, nf = w_s.shape

    # Pad every modality's feature dim to a common Dmax (multiple of 8 for sublane
    # tiling; NOT padded to 128 — the MXU handles short contractions, extra K
    # padding would only add DMA bytes).  Padded x columns hit zero W rows, so the
    # result is unchanged.
    Dmax = _round_up(max(x.shape[1] for x in input_feats), 8)

    in_dtype = jnp.bfloat16 if use_bf16 else jnp.float32

    x_stacked = jnp.stack([
        jnp.pad(x, ((0, 0), (0, Dmax - x.shape[1]))) for x in input_feats
    ]).astype(in_dtype)                                        # (M, B, Dmax)
    wf_stacked = jnp.stack([
        jnp.pad(w, ((0, Dmax - w.shape[0]), (0, 0))) for (w, _) in params["f2e"]
    ]).astype(in_dtype)                                        # (M, Dmax, nf)
    bf_stacked = jnp.stack([
        b.reshape(1, nf) for (_, b) in params["f2e"]
    ]).astype(jnp.float32)                                     # (M, 1, nf)

    sem = semantics.astype(in_dtype)                           # (B, S)
    ws = w_s.astype(in_dtype)                                  # (S, nf)
    bs = b_s.reshape(1, nf).astype(jnp.float32)                # (1, nf)

    itemsize = jnp.dtype(in_dtype).itemsize
    flops = M * (2 * B * Dmax * nf + 2 * B * S * nf + 3 * B * nf)
    bytes_accessed = (
        x_stacked.size * itemsize + wf_stacked.size * itemsize
        + bf_stacked.size * 4 + sem.size * itemsize + ws.size * itemsize
        + bs.size * 4 + M * B * nf * 4
    )

    kernel = functools.partial(_fused_iel_kernel, multiply=multiply)
    out = pl.pallas_call(
        kernel,
        grid=(M,),
        in_specs=[
            pl.BlockSpec((None, B, Dmax), lambda m: (m, 0, 0)),   # x_i     (per branch)
            pl.BlockSpec((None, Dmax, nf), lambda m: (m, 0, 0)),  # W_i     (per branch)
            pl.BlockSpec((None, 1, nf), lambda m: (m, 0, 0)),     # b_i     (per branch)
            pl.BlockSpec((B, S), lambda m: (0, 0)),               # semantics (constant)
            pl.BlockSpec((S, nf), lambda m: (0, 0)),              # W_s       (constant)
            pl.BlockSpec((1, nf), lambda m: (0, 0)),              # b_s       (constant)
        ],
        out_specs=pl.BlockSpec((None, B, nf), lambda m: (m, 0, 0)),
        out_shape=jax.ShapeDtypeStruct((M, B, nf), jnp.float32),
        compiler_params=pltpu.CompilerParams(
            dimension_semantics=("parallel",)),   # shard modalities across v7x TCs
        cost_estimate=pl.CostEstimate(
            flops=flops, transcendentals=0, bytes_accessed=bytes_accessed),
    )(x_stacked, wf_stacked, bf_stacked, sem, ws, bs)

    return [out[i] for i in range(M)]


def _init_linear(key, in_features, out_features):
    # Mimic nn.Linear default init: U(-1/sqrt(in), 1/sqrt(in)); stored as (in, nf).
    kw, kb = jax.random.split(key)
    bound = 1.0 / math.sqrt(in_features)
    w = jax.random.uniform(kw, (in_features, out_features), jnp.float32, -bound, bound)
    b = jax.random.uniform(kb, (out_features,), jnp.float32, -bound, bound)
    return w, b


if __name__ == "__main__":
    key = jax.random.PRNGKey(0)

    # Small shapes consistent with the module.
    input_size = [32, 48]          # two modalities
    semantics_size = 24
    nf = 128
    B = 8

    k_params, k_data = jax.random.split(key)
    pkeys = jax.random.split(k_params, len(input_size) + 1)
    params = {
        "f2e": [_init_linear(pkeys[i], input_size[i], nf) for i in range(len(input_size))],
        "s2e": _init_linear(pkeys[-1], semantics_size, nf),
    }

    dkeys = jax.random.split(k_data, len(input_size) + 1)
    input_feats = [
        jax.random.normal(dkeys[i], (B, input_size[i]), jnp.float32)
        for i in range(len(input_size))
    ]
    semantics = jax.random.normal(dkeys[-1], (B, semantics_size), jnp.float32)

    # Pure-JAX reference.
    w_s, b_s = params["s2e"]
    se_ref = semantics @ w_s + b_s

    # f32 path, both combine modes.
    for multiply in (False, True):
        outs = semantics_enhanced_iel(input_feats, semantics, params, multiply=multiply)
        outs = [jax.block_until_ready(o) for o in outs]
        for i, (w_f, b_f) in enumerate(params["f2e"]):
            fe_ref = input_feats[i] @ w_f + b_f
            ref = se_ref * fe_ref if multiply else se_ref + fe_ref
            assert outs[i].shape == (B, nf)
            assert jnp.allclose(outs[i], ref, atol=1e-4, rtol=1e-4), \
                f"mismatch (multiply={multiply}) on branch {i}"

    # bf16-input fast path (DMA-bytes saver on v6e/v7x); f32 accumulation, looser tol.
    outs_bf16 = semantics_enhanced_iel(input_feats, semantics, params,
                                       multiply=False, use_bf16=True)
    outs_bf16 = [jax.block_until_ready(o) for o in outs_bf16]
    for i, (w_f, b_f) in enumerate(params["f2e"]):
        fe_ref = input_feats[i] @ w_f + b_f
        ref = se_ref + fe_ref
        assert jnp.allclose(outs_bf16[i], ref, atol=1e-1, rtol=1e-1), \
            f"bf16 mismatch on branch {i}"

    print("KERNEL_OK")
</pallas_src>

<mosaic_0001>
module attributes {stable_mosaic.version = 11 : i64} {
  func.func @_fused_iel_kernel(%arg0: i32, %arg1: memref<1x8x48xf32, #tpu.memory_space<vmem>>, %arg2: memref<1x48x128xf32, #tpu.memory_space<vmem>>, %arg3: memref<1x1x128xf32, #tpu.memory_space<vmem>>, %arg4: memref<8x24xf32, #tpu.memory_space<vmem>>, %arg5: memref<24x128xf32, #tpu.memory_space<vmem>>, %arg6: memref<1x128xf32, #tpu.memory_space<vmem>>, %arg7: memref<1x8x128xf32, #tpu.memory_space<vmem>>) attributes {dimension_semantics = [#tpu.dimension_semantics<parallel>], iteration_bounds = array<i64: 2>, scalar_prefetch = 0 : i64, scratch_operands = 0 : i64, tpu.core_type = #tpu.core_type<tc>, window_params = [{transform_indices = @transform_0, window_bounds = array<i64: 1, 8, 48>}, {transform_indices = @transform_1, window_bounds = array<i64: 1, 48, 128>}, {transform_indices = @transform_2, window_bounds = array<i64: 1, 1, 128>}, {pipeline_mode = #tpu.pipeline_mode<synchronous>, transform_indices = @transform_3, window_bounds = array<i64: 8, 24>}, {pipeline_mode = #tpu.pipeline_mode<synchronous>, transform_indices = @transform_4, window_bounds = array<i64: 24, 128>}, {pipeline_mode = #tpu.pipeline_mode<synchronous>, transform_indices = @transform_5, window_bounds = array<i64: 1, 128>}, {transform_indices = @transform_6, window_bounds = array<i64: 1, 8, 128>}]} {
    %c0 = arith.constant 0 : index
    %c0_0 = arith.constant 0 : index
    %c0_1 = arith.constant 0 : index
    %0 = vector.load %arg1[%c0, %c0_0, %c0_1] : memref<1x8x48xf32, #tpu.memory_space<vmem>>, vector<1x8x48xf32>
    %1 = vector.shape_cast %0 : vector<1x8x48xf32> to vector<8x48xf32>
    %c0_2 = arith.constant 0 : index
    %c0_3 = arith.constant 0 : index
    %c0_4 = arith.constant 0 : index
    %2 = vector.load %arg2[%c0_2, %c0_3, %c0_4] : memref<1x48x128xf32, #tpu.memory_space<vmem>>, vector<1x48x128xf32>
    %3 = vector.shape_cast %2 : vector<1x48x128xf32> to vector<48x128xf32>
    %cst = arith.constant dense<0.000000e+00> : vector<8x128xf32>
    %4 = tpu.matmul %1, %3, %cst {dimension_numbers = #tpu.dot_dimension_numbers<[1], [0], [0], [1], [0, 0, 1, 1], [], []>} : vector<8x48xf32>, vector<48x128xf32>, vector<8x128xf32> -> vector<8x128xf32>
    %c0_5 = arith.constant 0 : index
    %c0_6 = arith.constant 0 : index
    %c0_7 = arith.constant 0 : index
    %5 = vector.load %arg3[%c0_5, %c0_6, %c0_7] : memref<1x1x128xf32, #tpu.memory_space<vmem>>, vector<1x1x128xf32>
    %6 = vector.shape_cast %5 : vector<1x1x128xf32> to vector<1x128xf32>
    %7 = vector.broadcast %6 : vector<1x128xf32> to vector<8x128xf32>
    %8 = arith.addf %4, %7 : vector<8x128xf32>
    %c0_8 = arith.constant 0 : index
    %c0_9 = arith.constant 0 : index
    %9 = vector.load %arg4[%c0_8, %c0_9] : memref<8x24xf32, #tpu.memory_space<vmem>>, vector<8x24xf32>
    %c0_10 = arith.constant 0 : index
    %c0_11 = arith.constant 0 : index
    %10 = vector.load %arg5[%c0_10, %c0_11] : memref<24x128xf32, #tpu.memory_space<vmem>>, vector<24x128xf32>
    %cst_12 = arith.constant dense<0.000000e+00> : vector<8x128xf32>
    %11 = tpu.matmul %9, %10, %cst_12 {dimension_numbers = #tpu.dot_dimension_numbers<[1], [0], [0], [1], [0, 0, 1, 1], [], []>} : vector<8x24xf32>, vector<24x128xf32>, vector<8x128xf32> -> vector<8x128xf32>
    %c0_13 = arith.constant 0 : index
    %c0_14 = arith.constant 0 : index
    %12 = vector.load %arg6[%c0_13, %c0_14] : memref<1x128xf32, #tpu.memory_space<vmem>>, vector<1x128xf32>
    %13 = vector.broadcast %12 : vector<1x128xf32> to vector<8x128xf32>
    %14 = arith.addf %11, %13 : vector<8x128xf32>
    %15 = arith.addf %14, %8 : vector<8x128xf32>
    %c0_15 = arith.constant 0 : index
    %c0_16 = arith.constant 0 : index
    %c0_17 = arith.constant 0 : index
    %16 = vector.load %arg7[%c0_15, %c0_16, %c0_17] : memref<1x8x128xf32, #tpu.memory_space<vmem>>, vector<1x8x128xf32>
    %17 = vector.shape_cast %16 : vector<1x8x128xf32> to vector<8x128xf32>
    %18 = vector.shape_cast %15 : vector<8x128xf32> to vector<1x8x128xf32>
    tpu.vector_store %arg7[%c0_15, %c0_16, %c0_17], %18 {strides = array<i32>} : memref<1x8x128xf32, #tpu.memory_space<vmem>>, vector<1x8x128xf32>,
    return
  }
  func.func @transform_0(%arg0: i32) -> (i32, i32, i32) {
    %c0_i32 = arith.constant 0 : i32
    %c0_i32_0 = arith.constant 0 : i32
    %c0_i32_1 = arith.constant 0 : i32
    return %arg0, %c0_i32, %c0_i32_0 : i32, i32, i32
  }
  func.func @transform_1(%arg0: i32) -> (i32, i32, i32) {
    %c0_i32 = arith.constant 0 : i32
    %c0_i32_0 = arith.constant 0 : i32
    %c0_i32_1 = arith.constant 0 : i32
    return %arg0, %c0_i32, %c0_i32_0 : i32, i32, i32
  }
  func.func @transform_2(%arg0: i32) -> (i32, i32, i32) {
    %c0_i32 = arith.constant 0 : i32
    %c0_i32_0 = arith.constant 0 : i32
    %c0_i32_1 = arith.constant 0 : i32
    return %arg0, %c0_i32, %c0_i32_0 : i32, i32, i32
  }
  func.func @transform_3(%arg0: i32) -> (i32, i32) {
    %c0_i32 = arith.constant 0 : i32
    %c0_i32_0 = arith.constant 0 : i32
    %c0_i32_1 = arith.constant 0 : i32
    return %c0_i32, %c0_i32_0 : i32, i32
  }
  func.func @transform_4(%arg0: i32) -> (i32, i32) {
    %c0_i32 = arith.constant 0 : i32
    %c0_i32_0 = arith.constant 0 : i32
    %c0_i32_1 = arith.constant 0 : i32
    return %c0_i32, %c0_i32_0 : i32, i32
  }
  func.func @transform_5(%arg0: i32) -> (i32, i32) {
    %c0_i32 = arith.constant 0 : i32
    %c0_i32_0 = arith.constant 0 : i32
    %c0_i32_1 = arith.constant 0 : i32
    return %c0_i32, %c0_i32_0 : i32, i32
  }
  func.func @transform_6(%arg0: i32) -> (i32, i32, i32) {
    %c0_i32 = arith.constant 0 : i32
    %c0_i32_0 = arith.constant 0 : i32
    %c0_i32_1 = arith.constant 0 : i32
    return %arg0, %c0_i32, %c0_i32_0 : i32, i32, i32
  }
}

</mosaic_0001>

<llo_original>
// kernel: semantics_enhanced_iel.1
$region0: #{semantics_enhanced_iel.1}
  #allocation0 [shape = 'u32[]', space=smem, size = 0x4, offset = 0x4, fixed_abs, tag = 'smem constant byte address 0x4 - core index']
  #allocation1 [shape = 'u32[144,128]{1,0:T(1,128)}', space=vmem, size = 0x12000, scoped, tag = 'internal scratch']
  %s0 = inlined_call_operand.vmem [shape: f32[2,8,48], index: 0, kind: input, shape index: {}]
  %s1 = inlined_call_operand.vmem [shape: f32[2,48,128], index: 1, kind: input, shape index: {}]
  %s2 = inlined_call_operand.vmem [shape: f32[2,1,128], index: 2, kind: input, shape index: {}]
  %s3 = inlined_call_operand.vmem [shape: f32[8,24], index: 3, kind: input, shape index: {}]
  %s4 = inlined_call_operand.vmem [shape: f32[24,128], index: 4, kind: input, shape index: {}]
  %s5 = inlined_call_operand.vmem [shape: f32[1,128], index: 5, kind: input, shape index: {}]
  %s6 = inlined_call_operand.vmem [shape: f32[2,8,128], index: 6, kind: output, shape index: {}]
  %s7 = sld [smem:[#allocation0]]
  $region57: #{semantics_enhanced_iel.1} parent=0
    _
  %s9 = ssub.s32 1, %s7
  %s10 = scalar_select 0, %s9, %s7
  loop: start=0, step=1, limit=4
  $region2: #{semantics_enhanced_iel.1} parent=0 // loop_pre_header
    _
  $region3: #{semantics_enhanced_iel.1} parent=0 // loop_header
    %s12 = sphi 0, %s16
    %p13 = scmp.ge.s32.totalorder %s12, 4
    %s22 = sphi 0, %s24
    %s25 = sphi 0, %s22
    %s26 = sphi 0, %s25
    %s42 = sphi 0, %s26
    %s48 = sphi 0, %s50
    %s51 = sphi 0, %s48
    %s52 = sphi 0, %s51
    %s68 = sphi 0, %s52
    %s74 = sphi 0, %s76
    %s77 = sphi 0, %s74
    %s78 = sphi 0, %s77
    %s94 = sphi 0, %s78
    %s98 = sphi 0, %s98
    %s100 = sphi 0, %s98
    %s101 = sphi 0, %s100
    %s115 = sphi 0, %s101
    %s119 = sphi 0, %s119
    %s121 = sphi 0, %s119
    %s122 = sphi 0, %s121
    %s136 = sphi 0, %s122
    %s140 = sphi 0, %s140
    %s142 = sphi 0, %s140
    %s143 = sphi 0, %s142
    %s157 = sphi 0, %s143
    %s163 = sphi 0, %s165
    %s166 = sphi 0, %s163
    %s167 = sphi 0, %s166
    %s183 = sphi 0, %s167
  $region4: #{semantics_enhanced_iel.1} parent=0 // loop_header_branch
    %15 = sbr.rel (%p13) target = $region8
  $region5: #{semantics_enhanced_iel.1} parent=0 // loop_body
    %s17 = ssub.s32 %s12, 1
    %s18 = ssub.s32 %s12, 2
    %s19 = sadd.s32 %s12, 1
    %s20 = ssub.s32 %s12, %s19
    %p21 = scmp.eq.s32.totalorder %s20, 0
    %s23 = sadd.s32 %s22, 1
    %s24 = scalar_select %p21, %s22, %s23
    %p27 = pneg %p21
    %p28 = scmp.eq.s32.totalorder %s12, 1
    %p29 = por %p27, %p28
    %p30 = scmp.ne.s32.totalorder %s22, %s25
    %p31 = scmp.eq.s32.totalorder %s12, 0
    %p32 = por %p30, %p31
    %p33 = scmp.ne.s32.totalorder %s22, %s25
    %p34 = scmp.eq.s32.totalorder %s17, 1
    %p35 = por %p33, %p34
    %p36 = scmp.ne.s32.totalorder %s25, %s26
    %p37 = scmp.eq.s32.totalorder %s17, 0
    %p38 = por %p36, %p37
    %p39 = scmp.ne.s32.totalorder %s25, %s26
    %p40 = scmp.eq.s32.totalorder %s18, 1
    %p41 = por %p39, %p40
    %p43 = scmp.ne.s32.totalorder %s26, %s42
    %p44 = scmp.eq.s32.totalorder %s18, 0
    %p45 = por %p43, %p44
    %s46 = ssub.s32 %s12, %s19
    %p47 = scmp.eq.s32.totalorder %s46, 0
    %s49 = sadd.s32 %s48, 1
    %s50 = scalar_select %p47, %s48, %s49
    %p53 = pneg %p47
    %p54 = scmp.eq.s32.totalorder %s12, 1
    %p55 = por %p53, %p54
    %p56 = scmp.ne.s32.totalorder %s48, %s51
    %p57 = scmp.eq.s32.totalorder %s12, 0
    %p58 = por %p56, %p57
    %p59 = scmp.ne.s32.totalorder %s48, %s51
    %p60 = scmp.eq.s32.totalorder %s17, 1
    %p61 = por %p59, %p60
    %p62 = scmp.ne.s32.totalorder %s51, %s52
    %p63 = scmp.eq.s32.totalorder %s17, 0
    %p64 = por %p62, %p63
    %p65 = scmp.ne.s32.totalorder %s51, %s52
    %p66 = scmp.eq.s32.totalorder %s18, 1
    %p67 = por %p65, %p66
    %p69 = scmp.ne.s32.totalorder %s52, %s68
    %p70 = scmp.eq.s32.totalorder %s18, 0
    %p71 = por %p69, %p70
    %s72 = ssub.s32 %s12, %s19
    %p73 = scmp.eq.s32.totalorder %s72, 0
    %s75 = sadd.s32 %s74, 1
    %s76 = scalar_select %p73, %s74, %s75
    %p79 = pneg %p73
    %p80 = scmp.eq.s32.totalorder %s12, 1
    %p81 = por %p79, %p80
    %p82 = scmp.ne.s32.totalorder %s74, %s77
    %p83 = scmp.eq.s32.totalorder %s12, 0
    %p84 = por %p82, %p83
    %p85 = scmp.ne.s32.totalorder %s74, %s77
    %p86 = scmp.eq.s32.totalorder %s17, 1
    %p87 = por %p85, %p86
    %p88 = scmp.ne.s32.totalorder %s77, %s78
    %p89 = scmp.eq.s32.totalorder %s17, 0
    %p90 = por %p88, %p89
    %p91 = scmp.ne.s32.totalorder %s77, %s78
    %p92 = scmp.eq.s32.totalorder %s18, 1
    %p93 = por %p91, %p92
    %p95 = scmp.ne.s32.totalorder %s78, %s94
    %p96 = scmp.eq.s32.totalorder %s18, 0
    %p97 = por %p95, %p96
    %s99 = sadd.s32 %s98, 1
    %p102 = scmp.eq.s32.totalorder %s12, 1
    %p103 = scmp.ne.s32.totalorder %s98, %s100
    %p104 = scmp.eq.s32.totalorder %s12, 0
    %p105 = por %p103, %p104
    %p106 = scmp.ne.s32.totalorder %s98, %s100
    %p107 = scmp.eq.s32.totalorder %s17, 1
    %p108 = por %p106, %p107
    %p109 = scmp.ne.s32.totalorder %s100, %s101
    %p110 = scmp.eq.s32.totalorder %s17, 0
    %p111 = por %p109, %p110
    %p112 = scmp.ne.s32.totalorder %s100, %s101
    %p113 = scmp.eq.s32.totalorder %s18, 1
    %p114 = por %p112, %p113
    %p116 = scmp.ne.s32.totalorder %s101, %s115
    %p117 = scmp.eq.s32.totalorder %s18, 0
    %p118 = por %p116, %p117
    %s120 = sadd.s32 %s119, 1
    %p123 = scmp.eq.s32.totalorder %s12, 1
    %p124 = scmp.ne.s32.totalorder %s119, %s121
    %p125 = scmp.eq.s32.totalorder %s12, 0
    %p126 = por %p124, %p125
    %p127 = scmp.ne.s32.totalorder %s119, %s121
    %p128 = scmp.eq.s32.totalorder %s17, 1
    %p129 = por %p127, %p128
    %p130 = scmp.ne.s32.totalorder %s121, %s122
    %p131 = scmp.eq.s32.totalorder %s17, 0
    %p132 = por %p130, %p131
    %p133 = scmp.ne.s32.totalorder %s121, %s122
    %p134 = scmp.eq.s32.totalorder %s18, 1
    %p135 = por %p133, %p134
    %p137 = scmp.ne.s32.totalorder %s122, %s136
    %p138 = scmp.eq.s32.totalorder %s18, 0
    %p139 = por %p137, %p138
    %s141 = sadd.s32 %s140, 1
    %p144 = scmp.eq.s32.totalorder %s12, 1
    %p145 = scmp.ne.s32.totalorder %s140, %s142
    %p146 = scmp.eq.s32.totalorder %s12, 0
    %p147 = por %p145, %p146
    %p148 = scmp.ne.s32.totalorder %s140, %s142
    %p149 = scmp.eq.s32.totalorder %s17, 1
    %p150 = por %p148, %p149
    %p151 = scmp.ne.s32.totalorder %s142, %s143
    %p152 = scmp.eq.s32.totalorder %s17, 0
    %p153 = por %p151, %p152
    %p154 = scmp.ne.s32.totalorder %s142, %s143
    %p155 = scmp.eq.s32.totalorder %s18, 1
    %p156 = por %p154, %p155
    %p158 = scmp.ne.s32.totalorder %s143, %s157
    %p159 = scmp.eq.s32.totalorder %s18, 0
    %p160 = por %p158, %p159
    %s161 = ssub.s32 %s12, %s19
    %p162 = scmp.eq.s32.totalorder %s161, 0
    %s164 = sadd.s32 %s163, 1
    %s165 = scalar_select %p162, %s163, %s164
    %p168 = pneg %p162
    %p169 = scmp.eq.s32.totalorder %s12, 1
    %p170 = por %p168, %p169
    %p171 = scmp.ne.s32.totalorder %s163, %s166
    %p172 = scmp.eq.s32.totalorder %s12, 0
    %p173 = por %p171, %p172
    %p174 = scmp.ne.s32.totalorder %s163, %s166
    %p175 = scmp.eq.s32.totalorder %s17, 1
    %p176 = por %p174, %p175
    %p177 = scmp.ne.s32.totalorder %s166, %s167
    %p178 = scmp.eq.s32.totalorder %s17, 0
    %p179 = por %p177, %p178
    %p180 = scmp.ne.s32.totalorder %s166, %s167
    %p181 = scmp.eq.s32.totalorder %s18, 1
    %p182 = por %p180, %p181
    %p184 = scmp.ne.s32.totalorder %s167, %s183
    %p185 = scmp.eq.s32.totalorder %s18, 0
    %p186 = por %p184, %p185
    %p187 = scmp.le.s32.totalorder 1, %s12
    %p188 = scmp.lt.s32.totalorder %s12, 3
    %p189 = pnand %p187, %p188
    %p190 = pneg %p189
    // Predicated region
    $region9: #{semantics_enhanced_iel.1} parent=5 // pred_check
      _
    $region10: #{semantics_enhanced_iel.1} parent=5 // pred_check_branch
      %192 = sbr.rel (%p189) target = $region12
    $region11: #{semantics_enhanced_iel.1} parent=5 // pred_region
      %s193 = ssub.s32 %s12, 1
      // Predicated region
      $region13: #{semantics_enhanced_iel.1} parent=11 // pred_check
        %p194 = pneg %p111
      $region14: #{semantics_enhanced_iel.1} parent=11 // pred_check_branch
        %196 = sbr.rel (%p194) target = $region16
      $region15: #{semantics_enhanced_iel.1} parent=11 // pred_region
        _
      $region16: #{semantics_enhanced_iel.1} parent=11 // pred_fallthru
        _
      // Predicated region
      $region17: #{semantics_enhanced_iel.1} parent=11 // pred_check
        %p197 = pneg %p132
      $region18: #{semantics_enhanced_iel.1} parent=11 // pred_check_branch
        %199 = sbr.rel (%p197) target = $region20
      $region19: #{semantics_enhanced_iel.1} parent=11 // pred_region
        _
      $region20: #{semantics_enhanced_iel.1} parent=11 // pred_fallthru
        _
      // Predicated region
      $region21: #{semantics_enhanced_iel.1} parent=11 // pred_check
        %p200 = pneg %p153
      $region22: #{semantics_enhanced_iel.1} parent=11 // pred_check_branch
        %202 = sbr.rel (%p200) target = $region24
      $region23: #{semantics_enhanced_iel.1} parent=11 // pred_region
        _
      $region24: #{semantics_enhanced_iel.1} parent=11 // pred_fallthru
        _
    $region12: #{semantics_enhanced_iel.1} parent=5 // pred_fallthru
      _
    %p203 = scmp.lt.s32.totalorder %s12, 2
    // Predicated region
    $region25: #{semantics_enhanced_iel.1} parent=5 // pred_check
      %p204 = pneg %p203
    $region26: #{semantics_enhanced_iel.1} parent=5 // pred_check_branch
      %206 = sbr.rel (%p204) target = $region28
    $region27: #{semantics_enhanced_iel.1} parent=5 // pred_region
      // Predicated region
      $region29: #{semantics_enhanced_iel.1} parent=27 // pred_check
        %p207 = pneg %p32
      $region30: #{semantics_enhanced_iel.1} parent=27 // pred_check_branch
        %209 = sbr.rel (%p207) target = $region32
      $region31: #{semantics_enhanced_iel.1} parent=27 // pred_region
        %p210 = scmp.lt.s32.totalorder %s12, 1
        %s211 = scalar_select %p210, %s12, 1
        %s212 = smul.addr %s211, 8
        %s213 = scalar_lea.vmem %s0, %s212
      $region32: #{semantics_enhanced_iel.1} parent=27 // pred_fallthru
        _
      // Predicated region
      $region33: #{semantics_enhanced_iel.1} parent=27 // pred_check
        %p214 = pneg %p58
      $region34: #{semantics_enhanced_iel.1} parent=27 // pred_check_branch
        %216 = sbr.rel (%p214) target = $region36
      $region35: #{semantics_enhanced_iel.1} parent=27 // pred_region
        %p217 = scmp.lt.s32.totalorder %s12, 1
        %s218 = scalar_select %p217, %s12, 1
        %s219 = smul.addr %s218, 6
        %s220 = smul.addr %s219, 8
        %s221 = scalar_lea.vmem %s1, %s220
      $region36: #{semantics_enhanced_iel.1} parent=27 // pred_fallthru
        _
      // Predicated region
      $region37: #{semantics_enhanced_iel.1} parent=27 // pred_check
        %p222 = pneg %p84
      $region38: #{semantics_enhanced_iel.1} parent=27 // pred_check_branch
        %224 = sbr.rel (%p222) target = $region40
      $region39: #{semantics_enhanced_iel.1} parent=27 // pred_region
        %p225 = scmp.lt.s32.totalorder %s12, 1
        %s226 = scalar_select %p225, %s12, 1
        %s227 = scalar_lea.vmem %s2, %s226
      $region40: #{semantics_enhanced_iel.1} parent=27 // pred_fallthru
        _
    $region28: #{semantics_enhanced_iel.1} parent=5 // pred_fallthru
      _
    %p228 = scmp.le.s32.totalorder 1, %s12
    %p229 = scmp.lt.s32.totalorder %s12, 3
    %p230 = pnand %p228, %p229
    %p231 = pneg %p230
    // Predicated region
    $region41: #{semantics_enhanced_iel.1} parent=5 // pred_check
      _
    $region42: #{semantics_enhanced_iel.1} parent=5 // pred_check_branch
      %233 = sbr.rel (%p230) target = $region44
    $region43: #{semantics_enhanced_iel.1} parent=5 // pred_region
      %s234 = ssub.s32 %s12, 1
      %p235 = scmp.lt.s32.totalorder %s17, 1
      %s236 = scalar_select %p235, %s17, 1
      %s237 = smul.addr %s236, 8
      %s238 = scalar_lea.vmem %s0, %s237
      %p239 = pneg %p38
      %p240 = pneg %p35
      %p241 = scmp.lt.s32.totalorder %s17, 1
      %s242 = scalar_select %p241, %s17, 1
      %s243 = smul.addr %s242, 6
      %s244 = smul.addr %s243, 8
      %s245 = scalar_lea.vmem %s1, %s244
      %p246 = pneg %p64
      %p247 = pneg %p61
      %p248 = scmp.lt.s32.totalorder %s17, 1
      %s249 = scalar_select %p248, %s17, 1
      %s250 = scalar_lea.vmem %s2, %s249
      %p251 = pneg %p90
      %p252 = pneg %p87
      %p253 = pneg %p111
      %p254 = pneg %p108
      %p255 = pneg %p132
      %p256 = pneg %p129
      %p257 = pneg %p153
      %p258 = pneg %p150
      %p259 = pneg %p179
      %p260 = pneg %p176
      %p261 = scmp.lt.s32.totalorder %s17, 1
      %s262 = scalar_select %p261, %s17, 1
      %s263 = smul.addr %s262, 8
      %s264 = scalar_lea.vmem %s6, %s263
      %p265 = scmp.lt.s32.totalorder %s17, 1
      %s266 = scalar_select %p265, %s17, 1
      %s267 = smul.addr %s266, 8
      %s268 = scalar_lea.vmem %s0, %s267
      %p269 = scmp.lt.s32.totalorder %s17, 1
      %s270 = scalar_select %p269, %s17, 1
      %s271 = smul.addr %s270, 6
      %s272 = smul.addr %s271, 8
      %s273 = scalar_lea.vmem %s1, %s272
      %p274 = scmp.lt.s32.totalorder %s17, 1
      %s275 = scalar_select %p274, %s17, 1
      %s276 = scalar_lea.vmem %s2, %s275
      %p277 = scmp.lt.s32.totalorder %s17, 1
      %s278 = scalar_select %p277, %s17, 1
      %s279 = smul.addr %s278, 8
      %s280 = scalar_lea.vmem %s6, %s279
      %v281 = vld [vmem:[%s268] sm:$0xff]
      %v282 = vld [vmem:[%s273] sm:$0xff]
      %v283 = vld [vmem:[%s273 + $0x8] sm:$0xff]
      %v284 = vld [vmem:[%s273 + $0x10] sm:$0xff]
      %v285 = vld [vmem:[%s273 + $0x18] sm:$0xff]
      %v286 = vld [vmem:[%s273 + $0x20] sm:$0xff]
      %v287 = vld [vmem:[%s273 + $0x28] sm:$0xff]
      %v288 = vld [vmem:[%s276] sm:$0x1]
      %v290 = vlaneseq
      %v291 = vshrl.u32 %v290, 7
      %v292 = vsub.s32 0, %v291
      %v293 = vrot.slane %v288, %v292
      %vm295 = vcmask 392192
      %v297 = vsel %vm295, %v281, 0
      %299 = vmatprep.subr.mxu0 0.0
      %300 = vmatpush1.msra.mxu0 %v282
      %301 = vmatprep.subr.mxu0 0.0
      %302 = vmatpush1.msra.mxu0 %v283
      %303 = vmatprep.subr.mxu0 0.0
      %304 = vmatpush1.msra.mxu0 %v284
      %305 = vmatprep.subr.mxu0 0.0
      %306 = vmatpush1.msra.mxu0 %v285
      %307 = vmatprep.subr.mxu0 0.0
      %308 = vmatpush1.msra.mxu0 %v286
      %309 = vmatprep.subr.mxu0 0.0
      %310 = vmatpush1.msra.mxu0 %v287
      %311 = vmatprep.subr.mxu0 0.0
      %312 = vmatpush1.msra.mxu0 0.0
      %313 = vmatprep.subr.mxu0 0.0
      %314 = vmatpush1.msra.mxu0 0.0
      %315 = vmatprep.subr.mxu0 0.0
      %316 = vmatpush1.msra.mxu0 0.0
      %317 = vmatprep.subr.mxu0 0.0
      %318 = vmatpush1.msra.mxu0 0.0
      %319 = vmatprep.subr.mxu0 0.0
      %320 = vmatpush1.msra.mxu0 0.0
      %321 = vmatprep.subr.mxu0 0.0
      %322 = vmatpush1.msra.mxu0 0.0
      %323 = vmatprep.subr.mxu0 0.0
      %324 = vmatpush1.msra.mxu0 0.0
      %325 = vmatprep.subr.mxu0 0.0
      %326 = vmatpush1.msra.mxu0 0.0
      %327 = vmatprep.subr.mxu0 0.0
      %328 = vmatpush1.msra.mxu0 0.0
      %329 = vmatprep.subr.mxu0 0.0
      %330 = vmatpush1.msra.mxu0 0.0
      %331 = vmatprep.subr.mxu0 0.0
      %332 = vmatpush1.msra.mxu0 0.0
      %333 = vmatprep.subr.mxu0 0.0
      %334 = vmatpush1.msra.mxu0 0.0
      %335 = vmatprep.subr.mxu0 0.0
      %336 = vmatpush1.msra.mxu0 0.0
      %337 = vmatprep.subr.mxu0 0.0
      %338 = vmatpush1.msra.mxu0 0.0
      %339 = vmatprep.subr.mxu0 0.0
      %340 = vmatpush1.msra.mxu0 0.0
      %341 = vmatprep.subr.mxu0 0.0
      %342 = vmatpush1.msra.mxu0 0.0
      %343 = vmatprep.subr.mxu0 0.0
      %344 = vmatpush1.msra.mxu0 0.0
      %345 = vmatprep.subr.mxu0 0.0
      %346 = vmatpush1.msra.mxu0 0.0
      %347 = vmatprep.subr.mxu0 0.0
      %348 = vmatpush1.msra.mxu0 0.0
      %349 = vmatprep.subr.mxu0 0.0
      %350 = vmatpush1.msra.mxu0 0.0
      %351 = vmatprep.subr.mxu0 0.0
      %352 = vmatpush1.msra.mxu0 0.0
      %353 = vmatprep.subr.mxu0 0.0
      %354 = vmatpush1.msra.mxu0 0.0
      %355 = vmatprep.subr.mxu0 0.0
      %356 = vmatpush1.msra.mxu0 0.0
      %357 = vmatprep.subr.mxu0 0.0
      %358 = vmatpush1.msra.mxu0 0.0
      %359 = vmatprep.subr.mxu0 0.0
      %360 = vmatpush1.msra.mxu0 0.0
      %361 = vmatprep.subr.mxu0 0.0
      %362 = vmatpush1.msra.mxu0 0.0
      %363 = vmatprep.mubr.f32.mxu0 0.0
      %364 = vmatmul.mubr.f32.gmra.mrb[0].mxu0 %v297
      %v365 = vpop.f32.mrb[0].mxu0
      %v366 = vadd.f32 %v293, %v365
      %v367 = vpop.f32.mrb[0].mxu0
      %368 = vdwg.mxu0
      %v369 = vld [vmem:[%s3] sm:$0xff]
      %v370 = vld [vmem:[%s4] sm:$0xff]
      %v371 = vld [vmem:[%s4 + $0x8] sm:$0xff]
      %v372 = vld [vmem:[%s4 + $0x10] sm:$0xff]
      %v373 = vld [vmem:[%s5] sm:$0x1]
      %v375 = vlaneseq
      %v376 = vshrl.u32 %v375, 7
      %v377 = vsub.s32 0, %v376
      %v378 = vrot.slane %v373, %v377
      %vm380 = vcmask 195584
      %v382 = vsel %vm380, %v369, 0
      %384 = vmatprep.subr.mxu0 0.0
      %385 = vmatpush1.msra.mxu0 %v370
      %386 = vmatprep.subr.mxu0 0.0
      %387 = vmatpush1.msra.mxu0 %v371
      %388 = vmatprep.subr.mxu0 0.0
      %389 = vmatpush1.msra.mxu0 %v372
      %390 = vmatprep.subr.mxu0 0.0
      %391 = vmatpush1.msra.mxu0 0.0
      %392 = vmatprep.subr.mxu0 0.0
      %393 = vmatpush1.msra.mxu0 0.0
      %394 = vmatprep.subr.mxu0 0.0
      %395 = vmatpush1.msra.mxu0 0.0
      %396 = vmatprep.subr.mxu0 0.0
      %397 = vmatpush1.msra.mxu0 0.0
      %398 = vmatprep.subr.mxu0 0.0
      %399 = vmatpush1.msra.mxu0 0.0
      %400 = vmatprep.subr.mxu0 0.0
      %401 = vmatpush1.msra.mxu0 0.0
      %402 = vmatprep.subr.mxu0 0.0
      %403 = vmatpush1.msra.mxu0 0.0
      %404 = vmatprep.subr.mxu0 0.0
      %405 = vmatpush1.msra.mxu0 0.0
      %406 = vmatprep.subr.mxu0 0.0
      %407 = vmatpush1.msra.mxu0 0.0
      %408 = vmatprep.subr.mxu0 0.0
      %409 = vmatpush1.msra.mxu0 0.0
      %410 = vmatprep.subr.mxu0 0.0
      %411 = vmatpush1.msra.mxu0 0.0
      %412 = vmatprep.subr.mxu0 0.0
      %413 = vmatpush1.msra.mxu0 0.0
      %414 = vmatprep.subr.mxu0 0.0
      %415 = vmatpush1.msra.mxu0 0.0
      %416 = vmatprep.subr.mxu0 0.0
      %417 = vmatpush1.msra.mxu0 0.0
      %418 = vmatprep.subr.mxu0 0.0
      %419 = vmatpush1.msra.mxu0 0.0
      %420 = vmatprep.subr.mxu0 0.0
      %421 = vmatpush1.msra.mxu0 0.0
      %422 = vmatprep.subr.mxu0 0.0
      %423 = vmatpush1.msra.mxu0 0.0
      %424 = vmatprep.subr.mxu0 0.0
      %425 = vmatpush1.msra.mxu0 0.0
      %426 = vmatprep.subr.mxu0 0.0
      %427 = vmatpush1.msra.mxu0 0.0
      %428 = vmatprep.subr.mxu0 0.0
      %429 = vmatpush1.msra.mxu0 0.0
      %430 = vmatprep.subr.mxu0 0.0
      %431 = vmatpush1.msra.mxu0 0.0
      %432 = vmatprep.subr.mxu0 0.0
      %433 = vmatpush1.msra.mxu0 0.0
      %434 = vmatprep.subr.mxu0 0.0
      %435 = vmatpush1.msra.mxu0 0.0
      %436 = vmatprep.subr.mxu0 0.0
      %437 = vmatpush1.msra.mxu0 0.0
      %438 = vmatprep.subr.mxu0 0.0
      %439 = vmatpush1.msra.mxu0 0.0
      %440 = vmatprep.subr.mxu0 0.0
      %441 = vmatpush1.msra.mxu0 0.0
      %442 = vmatprep.subr.mxu0 0.0
      %443 = vmatpush1.msra.mxu0 0.0
      %444 = vmatprep.subr.mxu0 0.0
      %445 = vmatpush1.msra.mxu0 0.0
      %446 = vmatprep.subr.mxu0 0.0
      %447 = vmatpush1.msra.mxu0 0.0
      %448 = vmatprep.mubr.f32.mxu0 0.0
      %449 = vmatmul.mubr.f32.gmra.mrb[0].mxu0 %v382
      %v450 = vpop.f32.mrb[0].mxu0
      %v451 = vadd.f32 %v378, %v450
      %v452 = vpop.f32.mrb[0].mxu0
      %453 = vdwg.mxu0
      %v454 = vadd.f32 %v451, %v366
      %455 = vst [vmem:[%s280] sm:$0xff] %v454
      %p456 = scmp.lt.s32.totalorder %s17, 1
      %s457 = scalar_select %p456, %s17, 1
      %s458 = smul.addr %s457, 8
      %s459 = scalar_lea.vmem %s6, %s458
      // Predicated region
      $region45: #{semantics_enhanced_iel.1} parent=43 // pred_check
        %p460 = pneg %p176
      $region46: #{semantics_enhanced_iel.1} parent=43 // pred_check_branch
        %462 = sbr.rel (%p460) target = $region48
      $region47: #{semantics_enhanced_iel.1} parent=43 // pred_region
        _
      $region48: #{semantics_enhanced_iel.1} parent=43 // pred_fallthru
        _
    $region44: #{semantics_enhanced_iel.1} parent=5 // pred_fallthru
      _
    %p463 = scmp.le.s32.totalorder 2, %s12
    // Predicated region
    $region49: #{semantics_enhanced_iel.1} parent=5 // pred_check
      %p464 = pneg %p463
    $region50: #{semantics_enhanced_iel.1} parent=5 // pred_check_branch
      %466 = sbr.rel (%p464) target = $region52
    $region51: #{semantics_enhanced_iel.1} parent=5 // pred_region
      %s467 = ssub.s32 %s12, 2
      // Predicated region
      $region53: #{semantics_enhanced_iel.1} parent=51 // pred_check
        %p468 = pneg %p182
      $region54: #{semantics_enhanced_iel.1} parent=51 // pred_check_branch
        %470 = sbr.rel (%p468) target = $region56
      $region55: #{semantics_enhanced_iel.1} parent=51 // pred_region
        %p471 = scmp.lt.s32.totalorder %s18, 1
        %s472 = scalar_select %p471, %s18, 1
        %s473 = smul.addr %s472, 8
        %s474 = scalar_lea.vmem %s6, %s473
      $region56: #{semantics_enhanced_iel.1} parent=51 // pred_fallthru
        _
    $region52: #{semantics_enhanced_iel.1} parent=5 // pred_fallthru
      _
  $region6: #{semantics_enhanced_iel.1} parent=0 // loop_footer
    %s16 = sadd.s32 1, %s12
  $region7: #{semantics_enhanced_iel.1} parent=0 // loop_footer_branch
    %11 = sbr.rel target = $region3
  $region8: #{semantics_enhanced_iel.1} parent=0 // loop_exit
    _

</llo_original>
